<compile_context>
chip_gen: v5e
topology: v5e:2x2
jax: 0.10.0
libtpu: 0.0.40
codegen_flags: <defaults>
</compile_context>

<pallas_src>
import jax
import jax.numpy as jnp
import numpy as np
from jax.experimental import pallas as pl
from jax.experimental.pallas import tpu as pltpu

KH = KW = 3
K_PAD = 128      # im2col contraction depth (KH*KW*C) zero-padded to a lane width
COUT_PAD = 128   # conv output channels zero-padded to a lane width
NC_PAD = 128     # logits zero-padded to a lane width


# ----------------------------------------------------------------------------
# Fused kernel: one grid step == one batch tile of images.
#   p_ref  : [Bt, HW, K_PAD]    bf16 im2col patches (lane-dense contraction)
#   w1_ref : [K_PAD, COUT_PAD]  bf16 conv weights (rows ordered kh, kw, c)
#   b1_ref : [1, COUT_PAD]      f32
#   w2_ref : [COUT_PAD, NC_PAD] bf16 classifier weights
#   b2_ref : [1, NC_PAD]        f32
#   o_ref  : [Bt, NC_PAD]       f32 lane-dense logits block
# ----------------------------------------------------------------------------
def _fused_forward_kernel(p_ref, w1_ref, b1_ref, w2_ref, b2_ref, o_ref):
    bt, hw, kp = p_ref.shape

    # Conv as ONE lane-dense MXU dot; accumulation lives in the MXU result
    # path / vregs (no VMEM scratch read-modify-write).
    lhs = p_ref[...].reshape(bt * hw, kp)                       # bf16 [Bt*HW, 128]
    h = jnp.dot(lhs, w1_ref[...], preferred_element_type=jnp.float32)
    h = jnp.maximum(h + b1_ref[...], 0.0)                       # bias + ReLU, f32 VPU

    # Global average pool: per-image sublane reduction (XLU slot has slack).
    pooled = jnp.mean(h.reshape(bt, hw, COUT_PAD), axis=1)      # [Bt, COUT_PAD] f32

    # Classifier dot (tiny) + bias; single unmasked lane-dense store.
    logits = jnp.dot(pooled.astype(jnp.bfloat16), w2_ref[...],
                     preferred_element_type=jnp.float32) + b2_ref[...]
    o_ref[...] = logits


def fused_conv_relu_pool_linear(patches, w1, b1, w2, b2, *, bt=None):
    B, HW, KP = patches.shape
    if bt is None:
        bt = B   # whole batch per step at these sizes (pays grid overhead once)
    assert B % bt == 0 and (bt == B or bt % 8 == 0), \
        "batch tile must equal B or be a multiple of 8 (output block tiling)"
    grid = (B // bt,)

    flops = B * (2 * HW * KP * COUT_PAD + 2 * COUT_PAD * NC_PAD)
    bytes_accessed = (patches.size * patches.dtype.itemsize
                      + w1.size * 2 + w2.size * 2
                      + b1.size * 4 + b2.size * 4
                      + B * NC_PAD * 4)

    # NOTE: grid is size 1 here, so weight multi-buffering never materializes;
    # with a longer batch grid, mark the weight specs pipeline_mode=pl.Buffered(1).
    return pl.pallas_call(
        _fused_forward_kernel,
        out_shape=jax.ShapeDtypeStruct((B, NC_PAD), jnp.float32),
        grid_spec=pltpu.PrefetchScalarGridSpec(
            num_scalar_prefetch=0,
            grid=grid,
            in_specs=[
                pl.BlockSpec((bt, HW, KP), lambda i: (i, 0, 0)),
                pl.BlockSpec((KP, COUT_PAD), lambda i: (0, 0)),
                pl.BlockSpec((1, COUT_PAD), lambda i: (0, 0)),
                pl.BlockSpec((COUT_PAD, NC_PAD), lambda i: (0, 0)),
                pl.BlockSpec((1, NC_PAD), lambda i: (0, 0)),
            ],
            out_specs=pl.BlockSpec((bt, NC_PAD), lambda i: (i, 0)),
        ),
        compiler_params=pltpu.CompilerParams(
            dimension_semantics=("parallel",)),
        cost_estimate=pl.CostEstimate(flops=flops, transcendentals=0,
                                      bytes_accessed=bytes_accessed),
    )(patches, w1, b1, w2, b2)


# ----------------------------------------------------------------------------
# Wrapper (exact pass-through semantics) + concrete net builder.
# ----------------------------------------------------------------------------
class RobustnessModelInnerWrapperPallas:
    """forward(x, **kwargs) = net(x) — exact pass-through semantics."""

    def __init__(self, net_fn):
        self.net = net_fn

    def __call__(self, x, **kwargs):
        return self.net(x)


def make_net(w_conv, b_conv, w_lin, b_lin):
    """Conv2d(C->Cout, 3x3, pad=1) -> ReLU -> global-avg-pool -> Linear(Cout->NC).
    Zero-pad + im2col run as cheap XLA layout ops; all compute is one Pallas kernel."""
    Cout, C = w_conv.shape[0], w_conv.shape[1]
    NC = w_lin.shape[0]
    K = KH * KW * C
    assert K <= K_PAD and Cout <= COUT_PAD and NC <= NC_PAD

    # Conv weight [Cout, C, 3, 3] -> rows ordered (kh, kw, c) to match im2col
    # column order; zero-pad to [K_PAD, COUT_PAD]; cast bf16 for the MXU.
    w1 = jnp.transpose(w_conv, (2, 3, 1, 0)).reshape(K, Cout)
    w1 = (jnp.zeros((K_PAD, COUT_PAD), jnp.float32)
          .at[:K, :Cout].set(w1).astype(jnp.bfloat16))
    b1 = jnp.zeros((1, COUT_PAD), jnp.float32).at[0, :Cout].set(b_conv)
    w2 = (jnp.zeros((COUT_PAD, NC_PAD), jnp.float32)
          .at[:Cout, :NC].set(w_lin.T).astype(jnp.bfloat16))
    b2 = jnp.zeros((1, NC_PAD), jnp.float32).at[0, :NC].set(b_lin)

    @jax.jit
    def net(x):                                     # x: NCHW [B, C, H, W]
        B, _, H, W = x.shape
        xp = jnp.transpose(x, (0, 2, 3, 1))         # NHWC
        xp = jnp.pad(xp, ((0, 0), (1, 1), (1, 1), (0, 0)))   # conv padding=1
        # im2col: 9 shifted windows concatenated along channels -> [B, HW, 9*C],
        # zero-padded to a full 128-lane contraction depth, bf16.
        cols = [xp[:, kh:kh + H, kw:kw + W, :]
                for kh in range(KH) for kw in range(KW)]
        patches = jnp.concatenate(cols, axis=-1).reshape(B, H * W, K)
        patches = jnp.pad(patches,
                          ((0, 0), (0, 0), (0, K_PAD - K))).astype(jnp.bfloat16)
        logits_pad = fused_conv_relu_pool_linear(patches, w1, b1, w2, b2)
        return logits_pad[:, :NC]                   # strip lane padding

    return net


if __name__ == "__main__":
    B, C, H, W = 2, 4, 16, 16
    Cout, NumClasses = 8, 10

    key = jax.random.PRNGKey(0)
    kx, kw1, kb1, kw2, kb2 = jax.random.split(key, 5)

    x = jax.random.normal(kx, (B, C, H, W), dtype=jnp.float32)
    w_conv = jax.random.normal(kw1, (Cout, C, 3, 3), dtype=jnp.float32) * 0.1
    b_conv = jax.random.normal(kb1, (Cout,), dtype=jnp.float32) * 0.1
    w_lin = jax.random.normal(kw2, (NumClasses, Cout), dtype=jnp.float32) * 0.1
    b_lin = jax.random.normal(kb2, (NumClasses,), dtype=jnp.float32) * 0.1

    model = RobustnessModelInnerWrapperPallas(make_net(w_conv, b_conv, w_lin, b_lin))
    out = model(x)
    jax.block_until_ready(out)
    assert out.shape == (B, NumClasses) and out.dtype == jnp.float32

    # Pure-JAX (f32) reference of the same net — correctness sanity check.
    y = jax.lax.conv_general_dilated(
        x, w_conv, window_strides=(1, 1), padding=((1, 1), (1, 1)),
        dimension_numbers=("NCHW", "OIHW", "NCHW"))
    y = jnp.maximum(y + b_conv.reshape(1, Cout, 1, 1), 0.0)
    ref = y.mean(axis=(2, 3)) @ w_lin.T + b_lin
    np.testing.assert_allclose(np.asarray(out), np.asarray(ref), rtol=2e-2, atol=2e-2)

    print("KERNEL_OK")
</pallas_src>

<mosaic_0001>
module attributes {stable_mosaic.version = 11 : i64} {
  func.func @_fused_forward_kernel(%arg0: i32, %arg1: memref<2x256x128xbf16, #tpu.memory_space<vmem>>, %arg2: memref<128x128xbf16, #tpu.memory_space<vmem>>, %arg3: memref<1x128xf32, #tpu.memory_space<vmem>>, %arg4: memref<128x128xbf16, #tpu.memory_space<vmem>>, %arg5: memref<1x128xf32, #tpu.memory_space<vmem>>, %arg6: memref<2x128xf32, #tpu.memory_space<vmem>>) attributes {dimension_semantics = [#tpu.dimension_semantics<parallel>], iteration_bounds = array<i64: 1>, scalar_prefetch = 0 : i64, scratch_operands = 0 : i64, tpu.core_type = #tpu.core_type<tc>, window_params = [{transform_indices = @transform_0, window_bounds = array<i64: 2, 256, 128>}, {pipeline_mode = #tpu.pipeline_mode<synchronous>, transform_indices = @transform_1, window_bounds = array<i64: 128, 128>}, {pipeline_mode = #tpu.pipeline_mode<synchronous>, transform_indices = @transform_2, window_bounds = array<i64: 1, 128>}, {pipeline_mode = #tpu.pipeline_mode<synchronous>, transform_indices = @transform_3, window_bounds = array<i64: 128, 128>}, {pipeline_mode = #tpu.pipeline_mode<synchronous>, transform_indices = @transform_4, window_bounds = array<i64: 1, 128>}, {transform_indices = @transform_5, window_bounds = array<i64: 2, 128>}]} {
    %c0 = arith.constant 0 : index
    %c0_0 = arith.constant 0 : index
    %c0_1 = arith.constant 0 : index
    %0 = vector.load %arg1[%c0, %c0_0, %c0_1] : memref<2x256x128xbf16, #tpu.memory_space<vmem>>, vector<2x256x128xbf16>
    %1 = vector.shape_cast %0 : vector<2x256x128xbf16> to vector<512x128xbf16>
    %c0_2 = arith.constant 0 : index
    %c0_3 = arith.constant 0 : index
    %2 = vector.load %arg2[%c0_2, %c0_3] : memref<128x128xbf16, #tpu.memory_space<vmem>>, vector<128x128xbf16>
    %cst = arith.constant dense<0.000000e+00> : vector<512x128xf32>
    %3 = tpu.matmul %1, %2, %cst {dimension_numbers = #tpu.dot_dimension_numbers<[1], [0], [0], [1], [0, 0, 1, 1], [], []>} : vector<512x128xbf16>, vector<128x128xbf16>, vector<512x128xf32> -> vector<512x128xf32>
    %c0_4 = arith.constant 0 : index
    %c0_5 = arith.constant 0 : index
    %4 = vector.load %arg3[%c0_4, %c0_5] : memref<1x128xf32, #tpu.memory_space<vmem>>, vector<1x128xf32>
    %5 = vector.broadcast %4 : vector<1x128xf32> to vector<512x128xf32>
    %6 = arith.addf %3, %5 : vector<512x128xf32>
    %cst_6 = arith.constant 0.000000e+00 : f32
    %7 = vector.broadcast %cst_6 : f32 to vector<512x128xf32>
    %8 = arith.maximumf %6, %7 : vector<512x128xf32>
    %9 = vector.shape_cast %8 : vector<512x128xf32> to vector<2x256x128xf32>
    %cst_7 = arith.constant dense<0.000000e+00> : vector<2x128xf32>
    %10 = vector.multi_reduction <add>, %9, %cst_7 [1] : vector<2x256x128xf32> to vector<2x128xf32>
    %cst_8 = arith.constant 2.560000e+02 : f32
    %11 = vector.broadcast %cst_8 : f32 to vector<2x128xf32>
    %12 = arith.divf %10, %11 : vector<2x128xf32>
    %13 = arith.truncf %12 : vector<2x128xf32> to vector<2x128xbf16>
    %c0_9 = arith.constant 0 : index
    %c0_10 = arith.constant 0 : index
    %14 = vector.load %arg4[%c0_9, %c0_10] : memref<128x128xbf16, #tpu.memory_space<vmem>>, vector<128x128xbf16>
    %cst_11 = arith.constant dense<0.000000e+00> : vector<2x128xf32>
    %15 = tpu.matmul %13, %14, %cst_11 {dimension_numbers = #tpu.dot_dimension_numbers<[1], [0], [0], [1], [0, 0, 1, 1], [], []>} : vector<2x128xbf16>, vector<128x128xbf16>, vector<2x128xf32> -> vector<2x128xf32>
    %c0_12 = arith.constant 0 : index
    %c0_13 = arith.constant 0 : index
    %16 = vector.load %arg5[%c0_12, %c0_13] : memref<1x128xf32, #tpu.memory_space<vmem>>, vector<1x128xf32>
    %17 = vector.broadcast %16 : vector<1x128xf32> to vector<2x128xf32>
    %18 = arith.addf %15, %17 : vector<2x128xf32>
    %c0_14 = arith.constant 0 : index
    %c0_15 = arith.constant 0 : index
    %19 = vector.load %arg6[%c0_14, %c0_15] : memref<2x128xf32, #tpu.memory_space<vmem>>, vector<2x128xf32>
    tpu.vector_store %arg6[%c0_14, %c0_15], %18 {strides = array<i32>} : memref<2x128xf32, #tpu.memory_space<vmem>>, vector<2x128xf32>,
    return
  }
  func.func @transform_0(%arg0: i32) -> (i32, i32, i32) {
    %c0_i32 = arith.constant 0 : i32
    %c0_i32_0 = arith.constant 0 : i32
    %c0_i32_1 = arith.constant 0 : i32
    return %arg0, %c0_i32, %c0_i32_0 : i32, i32, i32
  }
  func.func @transform_1(%arg0: i32) -> (i32, i32) {
    %c0_i32 = arith.constant 0 : i32
    %c0_i32_0 = arith.constant 0 : i32
    %c0_i32_1 = arith.constant 0 : i32
    return %c0_i32, %c0_i32_0 : i32, i32
  }
  func.func @transform_2(%arg0: i32) -> (i32, i32) {
    %c0_i32 = arith.constant 0 : i32
    %c0_i32_0 = arith.constant 0 : i32
    %c0_i32_1 = arith.constant 0 : i32
    return %c0_i32, %c0_i32_0 : i32, i32
  }
  func.func @transform_3(%arg0: i32) -> (i32, i32) {
    %c0_i32 = arith.constant 0 : i32
    %c0_i32_0 = arith.constant 0 : i32
    %c0_i32_1 = arith.constant 0 : i32
    return %c0_i32, %c0_i32_0 : i32, i32
  }
  func.func @transform_4(%arg0: i32) -> (i32, i32) {
    %c0_i32 = arith.constant 0 : i32
    %c0_i32_0 = arith.constant 0 : i32
    %c0_i32_1 = arith.constant 0 : i32
    return %c0_i32, %c0_i32_0 : i32, i32
  }
  func.func @transform_5(%arg0: i32) -> (i32, i32) {
    %c0_i32 = arith.constant 0 : i32
    %c0_i32_0 = arith.constant 0 : i32
    return %arg0, %c0_i32 : i32, i32
  }
}

</mosaic_0001>

<llo_original>
// kernel: net.1
$region0: #{net.1}
  #allocation0 [shape = 'u32[]', space=smem, size = 0x4, offset = 0x4, fixed_abs, tag = 'smem constant byte address 0x4 - core index']
  #allocation1 [shape = 'u32[72,128]{1,0:T(1,128)}', space=vmem, size = 0x9000, scoped, tag = 'internal scratch']
  %s0 = inlined_call_operand.vmem [shape: bf16[2,256,128], index: 0, kind: input, shape index: {}]
  %s1 = inlined_call_operand.vmem [shape: bf16[128,128], index: 1, kind: input, shape index: {}]
  %s2 = inlined_call_operand.vmem [shape: f32[1,128], index: 2, kind: input, shape index: {}]
  %s3 = inlined_call_operand.vmem [shape: bf16[128,128], index: 3, kind: input, shape index: {}]
  %s4 = inlined_call_operand.vmem [shape: f32[1,128], index: 4, kind: input, shape index: {}]
  %s5 = inlined_call_operand.hbm [shape: f32[2,128], index: 5, kind: output, shape index: {}]
  %s6 = sld [smem:[#allocation0]]
  $region30: #{net.1} parent=0
    _
  %s8 = ssub.s32 1, %s6
  %s9 = scalar_select 0, %s8, %s6
  $region1: #{net.1} parent=0
    #allocation2 [shape = 'u8[1024]{0}', space=vmem, size = 0x400, scoped, tag = 'output window, operand 0, single buffered']
    #allocation3 [shape = 's32[1]{0}', space=sflag, size = 0x4, scoped, tag = 'scoped memory for net.1']
    %10 = vsyncpa [#allocation3], 0
    // Predicated region
    $region2: #{net.1} parent=1 // pred_check
      _
    $region3: #{net.1} parent=1 // pred_check_branch
      %12 = sbr.rel (0) target = $region5
    $region4: #{net.1} parent=1 // pred_region
      _
    $region5: #{net.1} parent=1 // pred_fallthru
      _
    // Predicated region
    $region6: #{net.1} parent=1 // pred_check
      _
    $region7: #{net.1} parent=1 // pred_check_branch
      %14 = sbr.rel (0) target = $region9
    $region8: #{net.1} parent=1 // pred_region
      _
    $region9: #{net.1} parent=1 // pred_fallthru
      _
    // Predicated region
    $region10: #{net.1} parent=1 // pred_check
      _
    $region11: #{net.1} parent=1 // pred_check_branch
      %16 = sbr.rel (0) target = $region13
    $region12: #{net.1} parent=1 // pred_region
      _
    $region13: #{net.1} parent=1 // pred_fallthru
      _
    // Predicated region
    $region14: #{net.1} parent=1 // pred_check
      _
    $region15: #{net.1} parent=1 // pred_check_branch
      %18 = sbr.rel (0) target = $region17
    $region16: #{net.1} parent=1 // pred_region
      _
    $region17: #{net.1} parent=1 // pred_fallthru
      _
    // Predicated region
    $region18: #{net.1} parent=1 // pred_check
      _
    $region19: #{net.1} parent=1 // pred_check_branch
      %20 = sbr.rel (0) target = $region21
    $region20: #{net.1} parent=1 // pred_region
      _
    $region21: #{net.1} parent=1 // pred_fallthru
      _
    %v21 = vld [vmem:[%s0] sm:$0xf]
    %v22 = vld [vmem:[%s0 + $0x4] sm:$0xf]
    %v23 = vld [vmem:[%s0 + $0x8] sm:$0xf]
    %v24 = vld [vmem:[%s0 + $0xc] sm:$0xf]
    %v25 = vld [vmem:[%s0 + $0x10] sm:$0xf]
    %v26 = vld [vmem:[%s0 + $0x14] sm:$0xf]
    %v27 = vld [vmem:[%s0 + $0x18] sm:$0xf]
    %v28 = vld [vmem:[%s0 + $0x1c] sm:$0xf]
    %v29 = vld [vmem:[%s0 + $0x20] sm:$0xf]
    %v30 = vld [vmem:[%s0 + $0x24] sm:$0xf]
    %v31 = vld [vmem:[%s0 + $0x28] sm:$0xf]
    %v32 = vld [vmem:[%s0 + $0x2c] sm:$0xf]
    %v33 = vld [vmem:[%s0 + $0x30] sm:$0xf]
    %v34 = vld [vmem:[%s0 + $0x34] sm:$0xf]
    %v35 = vld [vmem:[%s0 + $0x38] sm:$0xf]
    %v36 = vld [vmem:[%s0 + $0x3c] sm:$0xf]
    %v37 = vld [vmem:[%s0 + $0x40] sm:$0xf]
    %v38 = vld [vmem:[%s0 + $0x44] sm:$0xf]
    %v39 = vld [vmem:[%s0 + $0x48] sm:$0xf]
    %v40 = vld [vmem:[%s0 + $0x4c] sm:$0xf]
    %v41 = vld [vmem:[%s0 + $0x50] sm:$0xf]
    %v42 = vld [vmem:[%s0 + $0x54] sm:$0xf]
    %v43 = vld [vmem:[%s0 + $0x58] sm:$0xf]
    %v44 = vld [vmem:[%s0 + $0x5c] sm:$0xf]
    %v45 = vld [vmem:[%s0 + $0x60] sm:$0xf]
    %v46 = vld [vmem:[%s0 + $0x64] sm:$0xf]
    %v47 = vld [vmem:[%s0 + $0x68] sm:$0xf]
    %v48 = vld [vmem:[%s0 + $0x6c] sm:$0xf]
    %v49 = vld [vmem:[%s0 + $0x70] sm:$0xf]
    %v50 = vld [vmem:[%s0 + $0x74] sm:$0xf]
    %v51 = vld [vmem:[%s0 + $0x78] sm:$0xf]
    %v52 = vld [vmem:[%s0 + $0x7c] sm:$0xf]
    %v53 = vld [vmem:[%s0 + $0x80] sm:$0xf]
    %v54 = vld [vmem:[%s0 + $0x84] sm:$0xf]
    %v55 = vld [vmem:[%s0 + $0x88] sm:$0xf]
    %v56 = vld [vmem:[%s0 + $0x8c] sm:$0xf]
    %v57 = vld [vmem:[%s0 + $0x90] sm:$0xf]
    %v58 = vld [vmem:[%s0 + $0x94] sm:$0xf]
    %v59 = vld [vmem:[%s0 + $0x98] sm:$0xf]
    %v60 = vld [vmem:[%s0 + $0x9c] sm:$0xf]
    %v61 = vld [vmem:[%s0 + $0xa0] sm:$0xf]
    %v62 = vld [vmem:[%s0 + $0xa4] sm:$0xf]
    %v63 = vld [vmem:[%s0 + $0xa8] sm:$0xf]
    %v64 = vld [vmem:[%s0 + $0xac] sm:$0xf]
    %v65 = vld [vmem:[%s0 + $0xb0] sm:$0xf]
    %v66 = vld [vmem:[%s0 + $0xb4] sm:$0xf]
    %v67 = vld [vmem:[%s0 + $0xb8] sm:$0xf]
    %v68 = vld [vmem:[%s0 + $0xbc] sm:$0xf]
    %v69 = vld [vmem:[%s0 + $0xc0] sm:$0xf]
    %v70 = vld [vmem:[%s0 + $0xc4] sm:$0xf]
    %v71 = vld [vmem:[%s0 + $0xc8] sm:$0xf]
    %v72 = vld [vmem:[%s0 + $0xcc] sm:$0xf]
    %v73 = vld [vmem:[%s0 + $0xd0] sm:$0xf]
    %v74 = vld [vmem:[%s0 + $0xd4] sm:$0xf]
    %v75 = vld [vmem:[%s0 + $0xd8] sm:$0xf]
    %v76 = vld [vmem:[%s0 + $0xdc] sm:$0xf]
    %v77 = vld [vmem:[%s0 + $0xe0] sm:$0xf]
    %v78 = vld [vmem:[%s0 + $0xe4] sm:$0xf]
    %v79 = vld [vmem:[%s0 + $0xe8] sm:$0xf]
    %v80 = vld [vmem:[%s0 + $0xec] sm:$0xf]
    %v81 = vld [vmem:[%s0 + $0xf0] sm:$0xf]
    %v82 = vld [vmem:[%s0 + $0xf4] sm:$0xf]
    %v83 = vld [vmem:[%s0 + $0xf8] sm:$0xf]
    %v84 = vld [vmem:[%s0 + $0xfc] sm:$0xf]
    %v85 = vld [vmem:[%s1] sm:$0xf]
    %v86 = vld [vmem:[%s1 + $0x4] sm:$0xf]
    %v87 = vld [vmem:[%s1 + $0x8] sm:$0xf]
    %v88 = vld [vmem:[%s1 + $0xc] sm:$0xf]
    %v89 = vld [vmem:[%s1 + $0x10] sm:$0xf]
    %v90 = vld [vmem:[%s1 + $0x14] sm:$0xf]
    %v91 = vld [vmem:[%s1 + $0x18] sm:$0xf]
    %v92 = vld [vmem:[%s1 + $0x1c] sm:$0xf]
    %v93 = vld [vmem:[%s1 + $0x20] sm:$0xf]
    %v94 = vld [vmem:[%s1 + $0x24] sm:$0xf]
    %v95 = vld [vmem:[%s1 + $0x28] sm:$0xf]
    %v96 = vld [vmem:[%s1 + $0x2c] sm:$0xf]
    %v97 = vld [vmem:[%s1 + $0x30] sm:$0xf]
    %v98 = vld [vmem:[%s1 + $0x34] sm:$0xf]
    %v99 = vld [vmem:[%s1 + $0x38] sm:$0xf]
    %v100 = vld [vmem:[%s1 + $0x3c] sm:$0xf]
    %v101 = vld [vmem:[%s2] sm:$0x1]
    %v103 = vperm.slane %v101, 0
    %v169 = vunpack.c.l.b16 %v21
    %v170 = vunpack.c.l.b16 %v22
    %v171 = vunpack.c.l.b16 %v23
    %v172 = vunpack.c.l.b16 %v24
    %v173 = vunpack.c.l.b16 %v25
    %v174 = vunpack.c.l.b16 %v26
    %v175 = vunpack.c.l.b16 %v27
    %v176 = vunpack.c.l.b16 %v28
    %v177 = vunpack.c.l.b16 %v29
    %v178 = vunpack.c.l.b16 %v30
    %v179 = vunpack.c.l.b16 %v31
    %v180 = vunpack.c.l.b16 %v32
    %v181 = vunpack.c.l.b16 %v33
    %v182 = vunpack.c.l.b16 %v34
    %v183 = vunpack.c.l.b16 %v35
    %v184 = vunpack.c.l.b16 %v36
    %v185 = vunpack.c.l.b16 %v37
    %v186 = vunpack.c.l.b16 %v38
    %v187 = vunpack.c.l.b16 %v39
    %v188 = vunpack.c.l.b16 %v40
    %v189 = vunpack.c.l.b16 %v41
    %v190 = vunpack.c.l.b16 %v42
    %v191 = vunpack.c.l.b16 %v43
    %v192 = vunpack.c.l.b16 %v44
    %v193 = vunpack.c.l.b16 %v45
    %v194 = vunpack.c.l.b16 %v46
    %v195 = vunpack.c.l.b16 %v47
    %v196 = vunpack.c.l.b16 %v48
    %v197 = vunpack.c.l.b16 %v49
    %v198 = vunpack.c.l.b16 %v50
    %v199 = vunpack.c.l.b16 %v51
    %v200 = vunpack.c.l.b16 %v52
    %v201 = vunpack.c.l.b16 %v53
    %v202 = vunpack.c.l.b16 %v54
    %v203 = vunpack.c.l.b16 %v55
    %v204 = vunpack.c.l.b16 %v56
    %v205 = vunpack.c.l.b16 %v57
    %v206 = vunpack.c.l.b16 %v58
    %v207 = vunpack.c.l.b16 %v59
    %v208 = vunpack.c.l.b16 %v60
    %v209 = vunpack.c.l.b16 %v61
    %v210 = vunpack.c.l.b16 %v62
    %v211 = vunpack.c.l.b16 %v63
    %v212 = vunpack.c.l.b16 %v64
    %v213 = vunpack.c.l.b16 %v65
    %v214 = vunpack.c.l.b16 %v66
    %v215 = vunpack.c.l.b16 %v67
    %v216 = vunpack.c.l.b16 %v68
    %v217 = vunpack.c.l.b16 %v69
    %v218 = vunpack.c.l.b16 %v70
    %v219 = vunpack.c.l.b16 %v71
    %v220 = vunpack.c.l.b16 %v72
    %v221 = vunpack.c.l.b16 %v73
    %v222 = vunpack.c.l.b16 %v74
    %v223 = vunpack.c.l.b16 %v75
    %v224 = vunpack.c.l.b16 %v76
    %v225 = vunpack.c.l.b16 %v77
    %v226 = vunpack.c.l.b16 %v78
    %v227 = vunpack.c.l.b16 %v79
    %v228 = vunpack.c.l.b16 %v80
    %v229 = vunpack.c.l.b16 %v81
    %v230 = vunpack.c.l.b16 %v82
    %v231 = vunpack.c.l.b16 %v83
    %v232 = vunpack.c.l.b16 %v84
    %v233 = vpack.c.b16 %v170, %v169
    %v234 = vpack.c.b16 %v172, %v171
    %v235 = vpack.c.b16 %v174, %v173
    %v236 = vpack.c.b16 %v176, %v175
    %v237 = vpack.c.b16 %v178, %v177
    %v238 = vpack.c.b16 %v180, %v179
    %v239 = vpack.c.b16 %v182, %v181
    %v240 = vpack.c.b16 %v184, %v183
    %v241 = vpack.c.b16 %v186, %v185
    %v242 = vpack.c.b16 %v188, %v187
    %v243 = vpack.c.b16 %v190, %v189
    %v244 = vpack.c.b16 %v192, %v191
    %v245 = vpack.c.b16 %v194, %v193
    %v246 = vpack.c.b16 %v196, %v195
    %v247 = vpack.c.b16 %v198, %v197
    %v248 = vpack.c.b16 %v200, %v199
    %v249 = vpack.c.b16 %v202, %v201
    %v250 = vpack.c.b16 %v204, %v203
    %v251 = vpack.c.b16 %v206, %v205
    %v252 = vpack.c.b16 %v208, %v207
    %v253 = vpack.c.b16 %v210, %v209
    %v254 = vpack.c.b16 %v212, %v211
    %v255 = vpack.c.b16 %v214, %v213
    %v256 = vpack.c.b16 %v216, %v215
    %v257 = vpack.c.b16 %v218, %v217
    %v258 = vpack.c.b16 %v220, %v219
    %v259 = vpack.c.b16 %v222, %v221
    %v260 = vpack.c.b16 %v224, %v223
    %v261 = vpack.c.b16 %v226, %v225
    %v262 = vpack.c.b16 %v228, %v227
    %v263 = vpack.c.b16 %v230, %v229
    %v264 = vpack.c.b16 %v232, %v231
    %v313 = vunpack.c.l.b16 %v85
    %v314 = vunpack.c.l.b16 %v86
    %v315 = vunpack.c.l.b16 %v87
    %v316 = vunpack.c.l.b16 %v88
    %v317 = vunpack.c.l.b16 %v89
    %v318 = vunpack.c.l.b16 %v90
    %v319 = vunpack.c.l.b16 %v91
    %v320 = vunpack.c.l.b16 %v92
    %v321 = vunpack.c.l.b16 %v93
    %v322 = vunpack.c.l.b16 %v94
    %v323 = vunpack.c.l.b16 %v95
    %v324 = vunpack.c.l.b16 %v96
    %v325 = vunpack.c.l.b16 %v97
    %v326 = vunpack.c.l.b16 %v98
    %v327 = vunpack.c.l.b16 %v99
    %v328 = vunpack.c.l.b16 %v100
    %v329 = vpack.c.b16 %v314, %v313
    %v330 = vpack.c.b16 %v316, %v315
    %v331 = vpack.c.b16 %v318, %v317
    %v332 = vpack.c.b16 %v320, %v319
    %v333 = vpack.c.b16 %v322, %v321
    %v334 = vpack.c.b16 %v324, %v323
    %v335 = vpack.c.b16 %v326, %v325
    %v336 = vpack.c.b16 %v328, %v327
    %345 = vmatpush.bf16.msra.mxu0 %v336
    %346 = vmatpush.bf16.msra.mxu0 %v335
    %347 = vmatpush.bf16.msra.mxu0 %v334
    %348 = vmatpush.bf16.msra.mxu0 %v333
    %349 = vmatpush.bf16.msra.mxu0 %v332
    %350 = vmatpush.bf16.msra.mxu0 %v331
    %351 = vmatpush.bf16.msra.mxu0 %v330
    %352 = vmatpush.bf16.msra.mxu0 %v329
    %353 = vmatmul.bf16.gmra.mxu0 %v233
    %v354 = vpop.f32.mrf.mxu0
    %v355 = vadd.f32 %v103, %v354
    %v356 = vpop.f32.mrf.mxu0
    %v357 = vadd.f32 %v103, %v356
    %358 = vmatmul.bf16.gmra.mxu0 %v234
    %v359 = vpop.f32.mrf.mxu0
    %v360 = vadd.f32 %v103, %v359
    %v361 = vpop.f32.mrf.mxu0
    %v362 = vadd.f32 %v103, %v361
    %363 = vmatmul.bf16.gmra.mxu0 %v235
    %v364 = vpop.f32.mrf.mxu0
    %v365 = vadd.f32 %v103, %v364
    %v366 = vpop.f32.mrf.mxu0
    %v367 = vadd.f32 %v103, %v366
    %368 = vmatmul.bf16.gmra.mxu0 %v236
    %v369 = vpop.f32.mrf.mxu0
    %v370 = vadd.f32 %v103, %v369
    %v371 = vpop.f32.mrf.mxu0
    %v372 = vadd.f32 %v103, %v371
    %373 = vmatmul.bf16.gmra.mxu0 %v237
    %v374 = vpop.f32.mrf.mxu0
    %v375 = vadd.f32 %v103, %v374
    %v376 = vpop.f32.mrf.mxu0
    %v377 = vadd.f32 %v103, %v376
    %378 = vmatmul.bf16.gmra.mxu0 %v238
    %v379 = vpop.f32.mrf.mxu0
    %v380 = vadd.f32 %v103, %v379
    %v381 = vpop.f32.mrf.mxu0
    %v382 = vadd.f32 %v103, %v381
    %383 = vmatmul.bf16.gmra.mxu0 %v239
    %v384 = vpop.f32.mrf.mxu0
    %v385 = vadd.f32 %v103, %v384
    %v386 = vpop.f32.mrf.mxu0
    %v387 = vadd.f32 %v103, %v386
    %388 = vmatmul.bf16.gmra.mxu0 %v240
    %v389 = vpop.f32.mrf.mxu0
    %v390 = vadd.f32 %v103, %v389
    %v391 = vpop.f32.mrf.mxu0
    %v392 = vadd.f32 %v103, %v391
    %393 = vmatmul.bf16.gmra.mxu0 %v241
    %v394 = vpop.f32.mrf.mxu0
    %v395 = vadd.f32 %v103, %v394
    %v396 = vpop.f32.mrf.mxu0
    %v397 = vadd.f32 %v103, %v396
    %398 = vmatmul.bf16.gmra.mxu0 %v242
    %v399 = vpop.f32.mrf.mxu0
    %v400 = vadd.f32 %v103, %v399
    %v401 = vpop.f32.mrf.mxu0
    %v402 = vadd.f32 %v103, %v401
    %403 = vmatmul.bf16.gmra.mxu0 %v243
    %v404 = vpop.f32.mrf.mxu0
    %v405 = vadd.f32 %v103, %v404
    %v406 = vpop.f32.mrf.mxu0
    %v407 = vadd.f32 %v103, %v406
    %408 = vmatmul.bf16.gmra.mxu0 %v244
    %v409 = vpop.f32.mrf.mxu0
    %v410 = vadd.f32 %v103, %v409
    %v411 = vpop.f32.mrf.mxu0
    %v412 = vadd.f32 %v103, %v411
    %413 = vmatmul.bf16.gmra.mxu0 %v245
    %v414 = vpop.f32.mrf.mxu0
    %v415 = vadd.f32 %v103, %v414
    %v416 = vpop.f32.mrf.mxu0
    %v417 = vadd.f32 %v103, %v416
    %418 = vmatmul.bf16.gmra.mxu0 %v246
    %v419 = vpop.f32.mrf.mxu0
    %v420 = vadd.f32 %v103, %v419
    %v421 = vpop.f32.mrf.mxu0
    %v422 = vadd.f32 %v103, %v421
    %423 = vmatmul.bf16.gmra.mxu0 %v247
    %v424 = vpop.f32.mrf.mxu0
    %v425 = vadd.f32 %v103, %v424
    %v426 = vpop.f32.mrf.mxu0
    %v427 = vadd.f32 %v103, %v426
    %428 = vmatmul.bf16.gmra.mxu0 %v248
    %v429 = vpop.f32.mrf.mxu0
    %v430 = vadd.f32 %v103, %v429
    %v431 = vpop.f32.mrf.mxu0
    %v432 = vadd.f32 %v103, %v431
    %433 = vmatmul.bf16.gmra.mxu0 %v249
    %v434 = vpop.f32.mrf.mxu0
    %v435 = vadd.f32 %v103, %v434
    %v436 = vpop.f32.mrf.mxu0
    %v437 = vadd.f32 %v103, %v436
    %438 = vmatmul.bf16.gmra.mxu0 %v250
    %v439 = vpop.f32.mrf.mxu0
    %v440 = vadd.f32 %v103, %v439
    %v441 = vpop.f32.mrf.mxu0
    %v442 = vadd.f32 %v103, %v441
    %443 = vmatmul.bf16.gmra.mxu0 %v251
    %v444 = vpop.f32.mrf.mxu0
    %v445 = vadd.f32 %v103, %v444
    %v446 = vpop.f32.mrf.mxu0
    %v447 = vadd.f32 %v103, %v446
    %448 = vmatmul.bf16.gmra.mxu0 %v252
    %v449 = vpop.f32.mrf.mxu0
    %v450 = vadd.f32 %v103, %v449
    %v451 = vpop.f32.mrf.mxu0
    %v452 = vadd.f32 %v103, %v451
    %453 = vmatmul.bf16.gmra.mxu0 %v253
    %v454 = vpop.f32.mrf.mxu0
    %v455 = vadd.f32 %v103, %v454
    %v456 = vpop.f32.mrf.mxu0
    %v457 = vadd.f32 %v103, %v456
    %458 = vmatmul.bf16.gmra.mxu0 %v254
    %v459 = vpop.f32.mrf.mxu0
    %v460 = vadd.f32 %v103, %v459
    %v461 = vpop.f32.mrf.mxu0
    %v462 = vadd.f32 %v103, %v461
    %463 = vmatmul.bf16.gmra.mxu0 %v255
    %v464 = vpop.f32.mrf.mxu0
    %v465 = vadd.f32 %v103, %v464
    %v466 = vpop.f32.mrf.mxu0
    %v467 = vadd.f32 %v103, %v466
    %468 = vmatmul.bf16.gmra.mxu0 %v256
    %v469 = vpop.f32.mrf.mxu0
    %v470 = vadd.f32 %v103, %v469
    %v471 = vpop.f32.mrf.mxu0
    %v472 = vadd.f32 %v103, %v471
    %473 = vmatmul.bf16.gmra.mxu0 %v257
    %v474 = vpop.f32.mrf.mxu0
    %v475 = vadd.f32 %v103, %v474
    %v476 = vpop.f32.mrf.mxu0
    %v477 = vadd.f32 %v103, %v476
    %478 = vmatmul.bf16.gmra.mxu0 %v258
    %v479 = vpop.f32.mrf.mxu0
    %v480 = vadd.f32 %v103, %v479
    %v481 = vpop.f32.mrf.mxu0
    %v482 = vadd.f32 %v103, %v481
    %483 = vmatmul.bf16.gmra.mxu0 %v259
    %v484 = vpop.f32.mrf.mxu0
    %v485 = vadd.f32 %v103, %v484
    %v486 = vpop.f32.mrf.mxu0
    %v487 = vadd.f32 %v103, %v486
    %488 = vmatmul.bf16.gmra.mxu0 %v260
    %v489 = vpop.f32.mrf.mxu0
    %v490 = vadd.f32 %v103, %v489
    %v491 = vpop.f32.mrf.mxu0
    %v492 = vadd.f32 %v103, %v491
    %493 = vmatmul.bf16.gmra.mxu0 %v261
    %v494 = vpop.f32.mrf.mxu0
    %v495 = vadd.f32 %v103, %v494
    %v496 = vpop.f32.mrf.mxu0
    %v497 = vadd.f32 %v103, %v496
    %498 = vmatmul.bf16.gmra.mxu0 %v262
    %v499 = vpop.f32.mrf.mxu0
    %v500 = vadd.f32 %v103, %v499
    %v501 = vpop.f32.mrf.mxu0
    %v502 = vadd.f32 %v103, %v501
    %503 = vmatmul.bf16.gmra.mxu0 %v263
    %v504 = vpop.f32.mrf.mxu0
    %v505 = vadd.f32 %v103, %v504
    %v506 = vpop.f32.mrf.mxu0
    %v507 = vadd.f32 %v103, %v506
    %508 = vmatmul.bf16.gmra.mxu0 %v264
    %v509 = vpop.f32.mrf.mxu0
    %v510 = vadd.f32 %v103, %v509
    %v511 = vpop.f32.mrf.mxu0
    %v512 = vadd.f32 %v103, %v511
    %513 = vdwg.mxu0
    %v514 = vmax.f32 %v355, 0.0
    %v515 = vmax.f32 %v357, 0.0
    %v516 = vmax.f32 %v360, 0.0
    %v517 = vmax.f32 %v362, 0.0
    %v518 = vmax.f32 %v365, 0.0
    %v519 = vmax.f32 %v367, 0.0
    %v520 = vmax.f32 %v370, 0.0
    %v521 = vmax.f32 %v372, 0.0
    %v522 = vmax.f32 %v375, 0.0
    %v523 = vmax.f32 %v377, 0.0
    %v524 = vmax.f32 %v380, 0.0
    %v525 = vmax.f32 %v382, 0.0
    %v526 = vmax.f32 %v385, 0.0
    %v527 = vmax.f32 %v387, 0.0
    %v528 = vmax.f32 %v390, 0.0
    %v529 = vmax.f32 %v392, 0.0
    %v530 = vmax.f32 %v395, 0.0
    %v531 = vmax.f32 %v397, 0.0
    %v532 = vmax.f32 %v400, 0.0
    %v533 = vmax.f32 %v402, 0.0
    %v534 = vmax.f32 %v405, 0.0
    %v535 = vmax.f32 %v407, 0.0
    %v536 = vmax.f32 %v410, 0.0
    %v537 = vmax.f32 %v412, 0.0
    %v538 = vmax.f32 %v415, 0.0
    %v539 = vmax.f32 %v417, 0.0
    %v540 = vmax.f32 %v420, 0.0
    %v541 = vmax.f32 %v422, 0.0
    %v542 = vmax.f32 %v425, 0.0
    %v543 = vmax.f32 %v427, 0.0
    %v544 = vmax.f32 %v430, 0.0
    %v545 = vmax.f32 %v432, 0.0
    %v546 = vmax.f32 %v435, 0.0
    %v547 = vmax.f32 %v437, 0.0
    %v548 = vmax.f32 %v440, 0.0
    %v549 = vmax.f32 %v442, 0.0
    %v550 = vmax.f32 %v445, 0.0
    %v551 = vmax.f32 %v447, 0.0
    %v552 = vmax.f32 %v450, 0.0
    %v553 = vmax.f32 %v452, 0.0
    %v554 = vmax.f32 %v455, 0.0
    %v555 = vmax.f32 %v457, 0.0
    %v556 = vmax.f32 %v460, 0.0
    %v557 = vmax.f32 %v462, 0.0
    %v558 = vmax.f32 %v465, 0.0
    %v559 = vmax.f32 %v467, 0.0
    %v560 = vmax.f32 %v470, 0.0
    %v561 = vmax.f32 %v472, 0.0
    %v562 = vmax.f32 %v475, 0.0
    %v563 = vmax.f32 %v477, 0.0
    %v564 = vmax.f32 %v480, 0.0
    %v565 = vmax.f32 %v482, 0.0
    %v566 = vmax.f32 %v485, 0.0
    %v567 = vmax.f32 %v487, 0.0
    %v568 = vmax.f32 %v490, 0.0
    %v569 = vmax.f32 %v492, 0.0
    %v570 = vmax.f32 %v495, 0.0
    %v571 = vmax.f32 %v497, 0.0
    %v572 = vmax.f32 %v500, 0.0
    %v573 = vmax.f32 %v502, 0.0
    %v574 = vmax.f32 %v505, 0.0
    %v575 = vmax.f32 %v507, 0.0
    %v576 = vmax.f32 %v510, 0.0
    %v577 = vmax.f32 %v512, 0.0
    %v578 = vadd.f32 %v514, %v515
    %v579 = vadd.f32 %v578, %v516
    %v580 = vadd.f32 %v579, %v517
    %v581 = vadd.f32 %v580, %v518
    %v582 = vadd.f32 %v581, %v519
    %v583 = vadd.f32 %v582, %v520
    %v584 = vadd.f32 %v583, %v521
    %v585 = vadd.f32 %v584, %v522
    %v586 = vadd.f32 %v585, %v523
    %v587 = vadd.f32 %v586, %v524
    %v588 = vadd.f32 %v587, %v525
    %v589 = vadd.f32 %v588, %v526
    %v590 = vadd.f32 %v589, %v527
    %v591 = vadd.f32 %v590, %v528
    %v592 = vadd.f32 %v591, %v529
    %v593 = vadd.f32 %v592, %v530
    %v594 = vadd.f32 %v593, %v531
    %v595 = vadd.f32 %v594, %v532
    %v596 = vadd.f32 %v595, %v533
    %v597 = vadd.f32 %v596, %v534
    %v598 = vadd.f32 %v597, %v535
    %v599 = vadd.f32 %v598, %v536
    %v600 = vadd.f32 %v599, %v537
    %v601 = vadd.f32 %v600, %v538
    %v602 = vadd.f32 %v601, %v539
    %v603 = vadd.f32 %v602, %v540
    %v604 = vadd.f32 %v603, %v541
    %v605 = vadd.f32 %v604, %v542
    %v606 = vadd.f32 %v605, %v543
    %v607 = vadd.f32 %v606, %v544
    %v608 = vadd.f32 %v607, %v545
    %v609 = vrot.slane %v608, 4
    %v610 = vadd.f32 %v608, %v609
    %v611 = vrot.slane %v610, 2
    %v612 = vadd.f32 %v610, %v611
    %v613 = vrot.slane %v612, 1
    %v614 = vadd.f32 %v612, %v613
    %v615 = vadd.f32 %v546, %v547
    %v616 = vadd.f32 %v615, %v548
    %v617 = vadd.f32 %v616, %v549
    %v618 = vadd.f32 %v617, %v550
    %v619 = vadd.f32 %v618, %v551
    %v620 = vadd.f32 %v619, %v552
    %v621 = vadd.f32 %v620, %v553
    %v622 = vadd.f32 %v621, %v554
    %v623 = vadd.f32 %v622, %v555
    %v624 = vadd.f32 %v623, %v556
    %v625 = vadd.f32 %v624, %v557
    %v626 = vadd.f32 %v625, %v558
    %v627 = vadd.f32 %v626, %v559
    %v628 = vadd.f32 %v627, %v560
    %v629 = vadd.f32 %v628, %v561
    %v630 = vadd.f32 %v629, %v562
    %v631 = vadd.f32 %v630, %v563
    %v632 = vadd.f32 %v631, %v564
    %v633 = vadd.f32 %v632, %v565
    %v634 = vadd.f32 %v633, %v566
    %v635 = vadd.f32 %v634, %v567
    %v636 = vadd.f32 %v635, %v568
    %v637 = vadd.f32 %v636, %v569
    %v638 = vadd.f32 %v637, %v570
    %v639 = vadd.f32 %v638, %v571
    %v640 = vadd.f32 %v639, %v572
    %v641 = vadd.f32 %v640, %v573
    %v642 = vadd.f32 %v641, %v574
    %v643 = vadd.f32 %v642, %v575
    %v644 = vadd.f32 %v643, %v576
    %v645 = vadd.f32 %v644, %v577
    %v646 = vrot.slane %v645, 4
    %v647 = vadd.f32 %v645, %v646
    %v648 = vrot.slane %v647, 2
    %v649 = vadd.f32 %v647, %v648
    %v650 = vrot.slane %v649, 1
    %v651 = vadd.f32 %v649, %v650
    %v652 = vrcp.pop 256.0
    %v653 = vmul.f32 256.0, %v652
    %v654 = vsub.f32 1.0, %v653
    %v655 = vmul.f32 %v652, %v654
    %v656 = vadd.f32 %v652, %v655
    %vm657 = vweird.f32 %v652
    %v658 = vsel %vm657, %v652, %v656
    %v659 = vmul.f32 %v614, %v658
    %v660 = vmul.f32 %v651, %v658
    %v661 = vpack.c.bf16 %v659, %v659
    %v662 = vpack.c.bf16 %v660, %v660
    %v663 = vld [vmem:[%s3] sm:$0xf]
    %v664 = vld [vmem:[%s3 + $0x4] sm:$0xf]
    %v665 = vld [vmem:[%s3 + $0x8] sm:$0xf]
    %v666 = vld [vmem:[%s3 + $0xc] sm:$0xf]
    %v667 = vld [vmem:[%s3 + $0x10] sm:$0xf]
    %v668 = vld [vmem:[%s3 + $0x14] sm:$0xf]
    %v669 = vld [vmem:[%s3 + $0x18] sm:$0xf]
    %v670 = vld [vmem:[%s3 + $0x1c] sm:$0xf]
    %v671 = vld [vmem:[%s3 + $0x20] sm:$0xf]
    %v672 = vld [vmem:[%s3 + $0x24] sm:$0xf]
    %v673 = vld [vmem:[%s3 + $0x28] sm:$0xf]
    %v674 = vld [vmem:[%s3 + $0x2c] sm:$0xf]
    %v675 = vld [vmem:[%s3 + $0x30] sm:$0xf]
    %v676 = vld [vmem:[%s3 + $0x34] sm:$0xf]
    %v677 = vld [vmem:[%s3 + $0x38] sm:$0xf]
    %v678 = vld [vmem:[%s3 + $0x3c] sm:$0xf]
    %v679 = vld [vmem:[%s4] sm:$0x1]
    %v681 = vperm.slane %v679, 0
    %v685 = vunpack.c.l.b16 %v661
    %v686 = vunpack.c.l.b16 %v662
    %vm687 = vcmask 1041409
    %v688 = vsel %vm687, %v686, %v685
    %v689 = vpack.c.b16 %v688, %v688
    %v707 = vunpack.c.l.b16 %v663
    %v708 = vunpack.c.l.b16 %v664
    %v709 = vunpack.c.l.b16 %v665
    %v710 = vunpack.c.l.b16 %v666
    %v711 = vunpack.c.l.b16 %v667
    %v712 = vunpack.c.l.b16 %v668
    %v713 = vunpack.c.l.b16 %v669
    %v714 = vunpack.c.l.b16 %v670
    %v715 = vunpack.c.l.b16 %v671
    %v716 = vunpack.c.l.b16 %v672
    %v717 = vunpack.c.l.b16 %v673
    %v718 = vunpack.c.l.b16 %v674
    %v719 = vunpack.c.l.b16 %v675
    %v720 = vunpack.c.l.b16 %v676
    %v721 = vunpack.c.l.b16 %v677
    %v722 = vunpack.c.l.b16 %v678
    %v723 = vpack.c.b16 %v708, %v707
    %v724 = vpack.c.b16 %v710, %v709
    %v725 = vpack.c.b16 %v712, %v711
    %v726 = vpack.c.b16 %v714, %v713
    %v727 = vpack.c.b16 %v716, %v715
    %v728 = vpack.c.b16 %v718, %v717
    %v729 = vpack.c.b16 %v720, %v719
    %v730 = vpack.c.b16 %v722, %v721
    %739 = vmatpush.bf16.msra.mxu0 %v730
    %740 = vmatpush.bf16.msra.mxu0 %v729
    %741 = vmatpush.bf16.msra.mxu0 %v728
    %742 = vmatpush.bf16.msra.mxu0 %v727
    %743 = vmatpush.bf16.msra.mxu0 %v726
    %744 = vmatpush.bf16.msra.mxu0 %v725
    %745 = vmatpush.bf16.msra.mxu0 %v724
    %746 = vmatpush.bf16.msra.mxu0 %v723
    %747 = vmatmul.bf16.gmra.mxu0 %v689
    %v748 = vpop.f32.mrf.mxu0
    %v749 = vadd.f32 %v681, %v748
    %v750 = vpop.f32.mrf.mxu0
    %751 = vdwg.mxu0
    %752 = vst [vmem:[#allocation2] sm:$0x3] %v749
    // Predicated region
    $region22: #{net.1} parent=1 // pred_check
      _
    $region23: #{net.1} parent=1 // pred_check_branch
      %754 = sbr.rel (0) target = $region25
    $region24: #{net.1} parent=1 // pred_region
      %756 = vsyncadd [#allocation3], 0
      %s758 = sshll.u32 [#allocation2], 4
      %s759 = int_to_ptr.vmem [resolvable:$true] %s758
      %s760 = sshll.u32 %s5, 4
      %s761 = int_to_ptr.hbm [resolvable:$true] %s760
      %763 = dma.vmem_to_hbm [thread:$0]  %s759, 32, %s761, [#allocation3]
    $region25: #{net.1} parent=1 // pred_fallthru
      _
    // Predicated region
    $region26: #{net.1} parent=1 // pred_check
      _
    $region27: #{net.1} parent=1 // pred_check_branch
      %765 = sbr.rel (0) target = $region29
    $region28: #{net.1} parent=1 // pred_region
      %767 = dma.done [#allocation3], 32
    $region29: #{net.1} parent=1 // pred_fallthru
      _
    %768 = vsyncpa [#allocation3], 1

</llo_original>
